<compile_context>
chip_gen: v7x
topology: tpu7x:2x2x1
jax: 0.10.0
libtpu: 0.0.40
codegen_flags: <defaults>
</compile_context>

<pallas_src>
import functools

import jax
import jax.numpy as jnp
from jax import lax
from jax.experimental import pallas as pl
from jax.experimental.pallas import tpu as pltpu


# ----------------------------------------------------------------------------
# Kernels
# ----------------------------------------------------------------------------
def _conv_tile(w_ref, x_ref, *, K, dilation, L):
    """Dilated conv for one (channel-tile, batch-item) block.

    w_ref: (K, tc, Cin) weights; x_ref: (1, Cin, L + 2*pad) padded activations.
    The K dilated taps are static slices of the VMEM-resident activation tile
    (no HBM im2col); accumulation is f32 on the MXU.
    Returns (conv_f32 of shape (tc, L), loaded activation tile (Cin, L + 2*pad)).
    """
    xb = x_ref[0]                                              # (Cin, Lp)
    conv = jnp.dot(w_ref[0], xb[:, 0:L], preferred_element_type=jnp.float32)
    for k in range(1, K):
        off = k * dilation
        conv = conv + jnp.dot(w_ref[k], xb[:, off:off + L],
                              preferred_element_type=jnp.float32)
    return conv, xb


def _tcn_stats_kernel(w_ref, x_ref, sum_ref, sq_ref, *, K, dilation, L):
    """Pass 1: per-channel sum / sum-of-squares of the bias-free conv output,
    accumulated across the batch ("arbitrary") grid axis."""
    @pl.when(pl.program_id(1) == 0)
    def _init():
        sum_ref[...] = jnp.zeros_like(sum_ref)
        sq_ref[...] = jnp.zeros_like(sq_ref)

    conv, _ = _conv_tile(w_ref, x_ref, K=K, dilation=dilation, L=L)
    sum_ref[...] += jnp.sum(conv, axis=1, keepdims=True)       # (tc, 1)
    sq_ref[...] += jnp.sum(conv * conv, axis=1, keepdims=True)  # (tc, 1)


def _tcn_apply_kernel(w_ref, x_ref, a_ref, c_ref, *rest, K, dilation, L, pad,
                      tc, identity):
    """Pass 2: recompute conv tile, apply BN affine + ReLU + residual, and write
    the output directly in the PyTorch (N, Cout, L) layout."""
    if identity:
        (o_ref,) = rest
    else:
        wds_ref, bds_ref, o_ref = rest

    conv, xb = _conv_tile(w_ref, x_ref, K=K, dilation=dilation, L=L)
    y = jnp.maximum(conv * a_ref[...] + c_ref[...], 0.0)       # (tc, L), f32

    if identity:
        # Identity residual: slice the matching channel rows straight out of the
        # VMEM-resident activation tile (no eye() matmul rows).
        co0 = pl.multiple_of(pl.program_id(0) * tc, tc)
        res = x_ref[0, pl.ds(co0, tc), pl.ds(pad, L)].astype(jnp.float32)
    else:
        # Real 1x1 downsample: small matmul on the un-shifted (center) tap.
        xc = xb[:, pad:pad + L]                                 # (Cin, L)
        res = jnp.dot(wds_ref[...], xc,
                      preferred_element_type=jnp.float32) + bds_ref[...]

    o_ref[0] = (y + res).astype(o_ref.dtype)


# ----------------------------------------------------------------------------
# Wrapper
# ----------------------------------------------------------------------------
def _pick_channel_tile(c_out):
    """Channel-tile size: <= 128, multiple of 8, and >= 2 tiles when possible so
    the 'parallel' channel axis actually splits across v7x's two TensorCores
    (single-TC v5e/v6e are unaffected)."""
    for cand in (128, 64, 32, 16, 8):
        if c_out % cand == 0 and c_out // cand >= 2:
            return cand
    return c_out


def dilated_tcn_block(x, params, *, kernel_size=3, dilation=1, eps=1e-5,
                      mxu_dtype=jnp.bfloat16):
    """x: (N, Cin, L) float32 — same layout as the PyTorch module's Conv1d input.
    Returns (N, Cout, L) in x.dtype, matching the module's training-mode forward."""
    N, Cin, L = x.shape
    w = params["w"]                                  # (Cout, Cin, K)
    gamma, beta = params["gamma"], params["beta"]    # (Cout,), (Cout,)
    Cout = w.shape[0]
    K = kernel_size
    if K % 2 != 1:
        # TODO(synk): even kernel_size makes the PyTorch conv output length
        # L - dilation, so the residual add no longer type-checks; only odd
        # kernel sizes are supported here.
        raise NotImplementedError("dilated_tcn_block supports odd kernel_size only")
    pad = dilation * (K - 1) // 2
    Lp = L + 2 * pad
    has_downsample = (Cin != Cout)

    # One padded activation slab, cast once to the MXU dtype (bf16 by default:
    # halves activation HBM traffic and VMEM footprint; accumulation stays f32).
    xpad = jnp.pad(x, ((0, 0), (0, 0), (pad, pad))).astype(mxu_dtype)  # (N, Cin, Lp)
    wk = jnp.transpose(w, (2, 0, 1)).astype(mxu_dtype)                 # (K, Cout, Cin)

    tc = _pick_channel_tile(Cout)
    n_co = Cout // tc

    # VMEM budget per grid step (double-buffered blocks + f32 temps), capped so
    # the same tiling also fits under v7x's 64 MiB physical VMEM.
    itemsize = jnp.dtype(mxu_dtype).itemsize
    blk_bytes = (2 * K * tc * Cin * itemsize           # conv-weight block
                 + 2 * Cin * Lp * itemsize             # padded-activation block
                 + 2 * tc * L * x.dtype.itemsize       # output block
                 + 3 * tc * L * 4                      # f32 conv / BN / ReLU temps
                 + Cin * L * 4                         # residual temp
                 + 16 * tc * 4)                        # scale/shift/stat blocks
    vmem_limit = int(min(max(32 * 1024 * 1024, 2 * blk_bytes), 56 * 1024 * 1024))
    # TODO(synk): extremely long single sequences (Cin * Lp approaching VMEM)
    # would need an extra L-tile grid axis with halo handling; typical TCN
    # shapes (L up to a few K, Cin up to a few hundred) fit comfortably.

    w_spec = pl.BlockSpec((K, tc, Cin), lambda co, n: (0, co, 0))
    x_spec = pl.BlockSpec((1, Cin, Lp), lambda co, n: (n, 0, 0))
    vec_spec = pl.BlockSpec((tc, 1), lambda co, n: (co, 0))

    # ---- pass 1: per-channel conv statistics (BatchNorm batch stats) --------
    s_sum, s_sq = pl.pallas_call(
        functools.partial(_tcn_stats_kernel, K=K, dilation=dilation, L=L),
        out_shape=(jax.ShapeDtypeStruct((Cout, 1), jnp.float32),
                   jax.ShapeDtypeStruct((Cout, 1), jnp.float32)),
        grid=(n_co, N),
        in_specs=[w_spec, x_spec],
        out_specs=(vec_spec, vec_spec),
        compiler_params=pltpu.CompilerParams(
            dimension_semantics=("parallel", "arbitrary"),
            vmem_limit_bytes=vmem_limit),
    )(wk, xpad)

    # ---- tiny per-channel epilogue constants (plain XLA; O(Cout) work) ------
    # Train-mode BatchNorm is invariant to the per-channel conv bias (it is
    # subtracted right back out with the batch mean), so the bias is dropped
    # entirely; taking stats on the bias-free conv also avoids the
    # E[x^2] - mean^2 cancellation risk for large biases. var is clamped >= 0.
    cnt = float(N * L)
    mean = s_sum[:, 0] / cnt                                    # (Cout,)
    var = jnp.maximum(s_sq[:, 0] / cnt - mean * mean, 0.0)
    a_vec = gamma.astype(jnp.float32) * lax.rsqrt(var + eps)
    c_vec = beta.astype(jnp.float32) - a_vec * mean
    a = a_vec.reshape(Cout, 1)
    c = c_vec.reshape(Cout, 1)

    # ---- pass 2: conv recompute + BN affine + ReLU + residual ---------------
    in_specs = [w_spec, x_spec, vec_spec, vec_spec]
    args = [wk, xpad, a, c]
    if has_downsample:
        w_ds = params["w_ds"][:, :, 0].astype(mxu_dtype)        # (Cout, Cin)
        b_ds = params["b_ds"].astype(jnp.float32).reshape(Cout, 1)
        in_specs += [pl.BlockSpec((tc, Cin), lambda co, n: (co, 0)), vec_spec]
        args += [w_ds, b_ds]

    out = pl.pallas_call(
        functools.partial(_tcn_apply_kernel, K=K, dilation=dilation, L=L,
                          pad=pad, tc=tc, identity=not has_downsample),
        out_shape=jax.ShapeDtypeStruct((N, Cout, L), x.dtype),
        grid=(n_co, N),
        in_specs=in_specs,
        out_specs=pl.BlockSpec((1, tc, L), lambda co, n: (n, co, 0)),
        compiler_params=pltpu.CompilerParams(
            dimension_semantics=("parallel", "parallel"),
            vmem_limit_bytes=vmem_limit),
    )(*args)

    # TODO(synk): BatchNorm running_mean/running_var buffer updates are a
    # training-time side effect that does not affect the returned tensor, so
    # they are not emulated here.
    return out


# ----------------------------------------------------------------------------
# Plain-JAX reference (training-mode semantics of the PyTorch module)
# ----------------------------------------------------------------------------
def _reference(x, params, *, kernel_size=3, dilation=1, eps=1e-5):
    w, b = params["w"], params["b"]
    gamma, beta = params["gamma"], params["beta"]
    Cin = x.shape[1]
    Cout = w.shape[0]
    pad = dilation * (kernel_size - 1) // 2
    conv = lax.conv_general_dilated(
        x, w, window_strides=(1,), padding=[(pad, pad)], rhs_dilation=(dilation,),
        dimension_numbers=("NCH", "OIH", "NCH")) + b[None, :, None]
    mean = jnp.mean(conv, axis=(0, 2), keepdims=True)
    var = jnp.mean((conv - mean) ** 2, axis=(0, 2), keepdims=True)
    y = gamma[None, :, None] * (conv - mean) * lax.rsqrt(var + eps) + beta[None, :, None]
    y = jnp.maximum(y, 0.0)
    if Cin != Cout:
        res = lax.conv_general_dilated(
            x, params["w_ds"], window_strides=(1,), padding=[(0, 0)],
            dimension_numbers=("NCH", "OIH", "NCH")) + params["b_ds"][None, :, None]
    else:
        res = x
    return y + res


if __name__ == "__main__":
    K, dilation = 3, 2
    key = jax.random.PRNGKey(0)
    ks = jax.random.split(key, 10)

    # ---- case 1: Cin != Cout -> fused 1x1-downsample residual (f32 MXU path) -
    N, Cin, Cout, L = 2, 4, 8, 16
    params = {
        "w": 0.1 * jax.random.normal(ks[0], (Cout, Cin, K), jnp.float32),
        "b": 0.05 * jax.random.normal(ks[1], (Cout,), jnp.float32),
        "gamma": 1.0 + 0.1 * jax.random.normal(ks[2], (Cout,), jnp.float32),
        "beta": 0.1 * jax.random.normal(ks[3], (Cout,), jnp.float32),
        "w_ds": 0.1 * jax.random.normal(ks[4], (Cout, Cin, 1), jnp.float32),
        "b_ds": 0.05 * jax.random.normal(ks[5], (Cout,), jnp.float32),
    }
    x = jax.random.normal(ks[6], (N, Cin, L), jnp.float32)

    out = jax.block_until_ready(
        dilated_tcn_block(x, params, kernel_size=K, dilation=dilation,
                          mxu_dtype=jnp.float32))
    ref = _reference(x, params, kernel_size=K, dilation=dilation)
    assert out.shape == (N, Cout, L)
    assert jnp.allclose(out, ref, atol=1e-4, rtol=1e-4), "mismatch (downsample, f32)"

    # ---- case 2: Cin == Cout -> identity residual, 2 channel tiles (f32) -----
    C2 = 16
    params2 = {
        "w": 0.1 * jax.random.normal(ks[7], (C2, C2, K), jnp.float32),
        "b": 0.05 * jax.random.normal(ks[8], (C2,), jnp.float32),
        "gamma": 1.0 + 0.1 * jax.random.normal(ks[2], (C2,), jnp.float32),
        "beta": 0.1 * jax.random.normal(ks[3], (C2,), jnp.float32),
    }
    x2 = jax.random.normal(ks[9], (N, C2, L), jnp.float32)
    out2 = jax.block_until_ready(
        dilated_tcn_block(x2, params2, kernel_size=K, dilation=dilation,
                          mxu_dtype=jnp.float32))
    ref2 = _reference(x2, params2, kernel_size=K, dilation=dilation)
    assert out2.shape == (N, C2, L)
    assert jnp.allclose(out2, ref2, atol=1e-4, rtol=1e-4), "mismatch (identity, f32)"

    # ---- case 3: default bf16 MXU operands (v6e/v7x recommendation) ----------
    out_bf16 = jax.block_until_ready(
        dilated_tcn_block(x, params, kernel_size=K, dilation=dilation))
    assert jnp.allclose(out_bf16, ref, atol=1e-1, rtol=1e-1), "mismatch (bf16 default)"

    print("KERNEL_OK")
</pallas_src>

<mosaic_0001>
module attributes {stable_mosaic.version = 11 : i64} {
  func.func @_tcn_stats_kernel(%arg0: i32, %arg1: i32, %arg2: memref<3x8x4xf32, #tpu.memory_space<vmem>>, %arg3: memref<1x4x20xf32, #tpu.memory_space<vmem>>, %arg4: memref<8x1xf32, #tpu.memory_space<vmem>>, %arg5: memref<8x1xf32, #tpu.memory_space<vmem>>) attributes {dimension_semantics = [#tpu.dimension_semantics<parallel>, #tpu.dimension_semantics<arbitrary>], iteration_bounds = array<i64: 1, 2>, scalar_prefetch = 0 : i64, scratch_operands = 0 : i64, tpu.core_type = #tpu.core_type<tc>, window_params = [{transform_indices = @transform_0, window_bounds = array<i64: 3, 8, 4>}, {transform_indices = @transform_1, window_bounds = array<i64: 1, 4, 20>}, {transform_indices = @transform_2, window_bounds = array<i64: 8, 1>}, {transform_indices = @transform_3, window_bounds = array<i64: 8, 1>}]} {
    %c0_i32 = arith.constant 0 : i32
    %0 = arith.cmpi eq, %arg1, %c0_i32 : i32
    %1 = arith.extui %0 : i1 to i32
    %c0_i32_0 = arith.constant 0 : i32
    %2 = arith.cmpi ne, %1, %c0_i32_0 : i32
    scf.if %2 {
      %cst_22 = arith.constant 0.000000e+00 : f32
      %30 = vector.broadcast %cst_22 : f32 to vector<8x1xf32>
      %c0_23 = arith.constant 0 : index
      %c0_24 = arith.constant 0 : index
      %31 = vector.load %arg4[%c0_23, %c0_24] : memref<8x1xf32, #tpu.memory_space<vmem>>, vector<8x1xf32>
      tpu.vector_store %arg4[%c0_23, %c0_24], %30 {strides = array<i32>} : memref<8x1xf32, #tpu.memory_space<vmem>>, vector<8x1xf32>,
      %cst_25 = arith.constant 0.000000e+00 : f32
      %32 = vector.broadcast %cst_25 : f32 to vector<8x1xf32>
      %c0_26 = arith.constant 0 : index
      %c0_27 = arith.constant 0 : index
      %33 = vector.load %arg5[%c0_26, %c0_27] : memref<8x1xf32, #tpu.memory_space<vmem>>, vector<8x1xf32>
      tpu.vector_store %arg5[%c0_26, %c0_27], %32 {strides = array<i32>} : memref<8x1xf32, #tpu.memory_space<vmem>>, vector<8x1xf32>,
    } else {
    }
    %c0 = arith.constant 0 : index
    %c0_1 = arith.constant 0 : index
    %c0_2 = arith.constant 0 : index
    %3 = vector.load %arg3[%c0, %c0_1, %c0_2] : memref<1x4x20xf32, #tpu.memory_space<vmem>>, vector<1x4x20xf32>
    %4 = vector.shape_cast %3 : vector<1x4x20xf32> to vector<4x20xf32>
    %c0_3 = arith.constant 0 : index
    %c0_4 = arith.constant 0 : index
    %c0_5 = arith.constant 0 : index
    %5 = vector.load %arg2[%c0_3, %c0_4, %c0_5] : memref<3x8x4xf32, #tpu.memory_space<vmem>>, vector<1x8x4xf32>
    %6 = vector.shape_cast %5 : vector<1x8x4xf32> to vector<8x4xf32>
    %7 = vector.extract_strided_slice %4 {offsets = [0, 0], sizes = [4, 16], strides = [1, 1]} : vector<4x20xf32> to vector<4x16xf32>
    %cst = arith.constant dense<0.000000e+00> : vector<8x16xf32>
    %8 = tpu.matmul %6, %7, %cst {dimension_numbers = #tpu.dot_dimension_numbers<[1], [0], [0], [1], [0, 0, 1, 1], [], []>} : vector<8x4xf32>, vector<4x16xf32>, vector<8x16xf32> -> vector<8x16xf32>
    %c1 = arith.constant 1 : index
    %c0_6 = arith.constant 0 : index
    %c0_7 = arith.constant 0 : index
    %9 = vector.load %arg2[%c1, %c0_6, %c0_7] : memref<3x8x4xf32, #tpu.memory_space<vmem>>, vector<1x8x4xf32>
    %10 = vector.shape_cast %9 : vector<1x8x4xf32> to vector<8x4xf32>
    %11 = vector.extract_strided_slice %4 {offsets = [0, 2], sizes = [4, 16], strides = [1, 1]} : vector<4x20xf32> to vector<4x16xf32>
    %cst_8 = arith.constant dense<0.000000e+00> : vector<8x16xf32>
    %12 = tpu.matmul %10, %11, %cst_8 {dimension_numbers = #tpu.dot_dimension_numbers<[1], [0], [0], [1], [0, 0, 1, 1], [], []>} : vector<8x4xf32>, vector<4x16xf32>, vector<8x16xf32> -> vector<8x16xf32>
    %13 = arith.addf %8, %12 : vector<8x16xf32>
    %c2 = arith.constant 2 : index
    %c0_9 = arith.constant 0 : index
    %c0_10 = arith.constant 0 : index
    %14 = vector.load %arg2[%c2, %c0_9, %c0_10] : memref<3x8x4xf32, #tpu.memory_space<vmem>>, vector<1x8x4xf32>
    %15 = vector.shape_cast %14 : vector<1x8x4xf32> to vector<8x4xf32>
    %16 = vector.extract_strided_slice %4 {offsets = [0, 4], sizes = [4, 16], strides = [1, 1]} : vector<4x20xf32> to vector<4x16xf32>
    %cst_11 = arith.constant dense<0.000000e+00> : vector<8x16xf32>
    %17 = tpu.matmul %15, %16, %cst_11 {dimension_numbers = #tpu.dot_dimension_numbers<[1], [0], [0], [1], [0, 0, 1, 1], [], []>} : vector<8x4xf32>, vector<4x16xf32>, vector<8x16xf32> -> vector<8x16xf32>
    %18 = arith.addf %13, %17 : vector<8x16xf32>
    %c0_12 = arith.constant 0 : index
    %c0_13 = arith.constant 0 : index
    %19 = vector.load %arg4[%c0_12, %c0_13] : memref<8x1xf32, #tpu.memory_space<vmem>>, vector<8x1xf32>
    %cst_14 = arith.constant dense<0.000000e+00> : vector<8xf32>
    %20 = vector.multi_reduction <add>, %18, %cst_14 [1] : vector<8x16xf32> to vector<8xf32>
    %21 = vector.shape_cast %20 : vector<8xf32> to vector<8x1xf32>
    %22 = arith.addf %19, %21 : vector<8x1xf32>
    %c0_15 = arith.constant 0 : index
    %c0_16 = arith.constant 0 : index
    %23 = vector.load %arg4[%c0_15, %c0_16] : memref<8x1xf32, #tpu.memory_space<vmem>>, vector<8x1xf32>
    tpu.vector_store %arg4[%c0_15, %c0_16], %22 {strides = array<i32>} : memref<8x1xf32, #tpu.memory_space<vmem>>, vector<8x1xf32>,
    %c0_17 = arith.constant 0 : index
    %c0_18 = arith.constant 0 : index
    %24 = vector.load %arg5[%c0_17, %c0_18] : memref<8x1xf32, #tpu.memory_space<vmem>>, vector<8x1xf32>
    %25 = arith.mulf %18, %18 : vector<8x16xf32>
    %cst_19 = arith.constant dense<0.000000e+00> : vector<8xf32>
    %26 = vector.multi_reduction <add>, %25, %cst_19 [1] : vector<8x16xf32> to vector<8xf32>
    %27 = vector.shape_cast %26 : vector<8xf32> to vector<8x1xf32>
    %28 = arith.addf %24, %27 : vector<8x1xf32>
    %c0_20 = arith.constant 0 : index
    %c0_21 = arith.constant 0 : index
    %29 = vector.load %arg5[%c0_20, %c0_21] : memref<8x1xf32, #tpu.memory_space<vmem>>, vector<8x1xf32>
    tpu.vector_store %arg5[%c0_20, %c0_21], %28 {strides = array<i32>} : memref<8x1xf32, #tpu.memory_space<vmem>>, vector<8x1xf32>,
    return
  }
  func.func @transform_0(%arg0: i32, %arg1: i32) -> (i32, i32, i32) {
    %c0_i32 = arith.constant 0 : i32
    %c0_i32_0 = arith.constant 0 : i32
    %c0_i32_1 = arith.constant 0 : i32
    return %c0_i32, %arg0, %c0_i32_0 : i32, i32, i32
  }
  func.func @transform_1(%arg0: i32, %arg1: i32) -> (i32, i32, i32) {
    %c0_i32 = arith.constant 0 : i32
    %c0_i32_0 = arith.constant 0 : i32
    %c0_i32_1 = arith.constant 0 : i32
    return %arg1, %c0_i32, %c0_i32_0 : i32, i32, i32
  }
  func.func @transform_2(%arg0: i32, %arg1: i32) -> (i32, i32) {
    %c0_i32 = arith.constant 0 : i32
    %c0_i32_0 = arith.constant 0 : i32
    return %arg0, %c0_i32 : i32, i32
  }
  func.func @transform_3(%arg0: i32, %arg1: i32) -> (i32, i32) {
    %c0_i32 = arith.constant 0 : i32
    %c0_i32_0 = arith.constant 0 : i32
    return %arg0, %c0_i32 : i32, i32
  }
}

</mosaic_0001>

<llo_original>
// kernel: tpu_custom_call.1
$region0: #{tpu_custom_call.1}
  #allocation0 [shape = 'u32[]', space=smem, size = 0x4, offset = 0x4, fixed_abs, tag = 'smem constant byte address 0x4 - core index']
  #allocation1 [shape = 'u32[144,128]{1,0:T(1,128)}', space=vmem, size = 0x12000, scoped, tag = 'internal scratch']
  %s0 = inlined_call_operand.vmem [shape: f32[3,8,4], index: 0, kind: input, shape index: {}]
  %s1 = inlined_call_operand.vmem [shape: f32[2,4,20], index: 1, kind: input, shape index: {}]
  %s2 = inlined_call_operand.vmem [shape: f32[8,1], index: 2, kind: output, shape index: {0}]
  %s3 = inlined_call_operand.vmem [shape: f32[8,1], index: 3, kind: output, shape index: {1}]
  %4 = xla_tuple %s2, %s3
  %s5 = sld [smem:[#allocation0]]
  $region53: #{tpu_custom_call.1} parent=0
    _
  %s7 = ssub.s32 1, %s5
  %s8 = scalar_select 0, %s7, %s5
  loop: start=0, step=1, limit=4
  $region2: #{tpu_custom_call.1} parent=0 // loop_pre_header
    _
  $region3: #{tpu_custom_call.1} parent=0 // loop_header
    %s10 = sphi 0, %s14
    %p11 = scmp.ge.s32.totalorder %s10, 4
    %s17 = sphi 0, %s29
    %s18 = sphi 0, %s25
    %s19 = sphi 0, %s17
    %s20 = sphi 0, %s18
    %s21 = sphi 0, %s19
    %s22 = sphi 0, %s20
    %s32 = sphi 0, %s34
    %s35 = sphi 0, %s32
    %s36 = sphi 0, %s35
    %s52 = sphi 0, %s36
    %s58 = sphi 0, %s60
    %s61 = sphi 0, %s58
    %s62 = sphi 0, %s61
    %s78 = sphi 0, %s62
    %s84 = sphi 0, %s86
    %s87 = sphi 0, %s84
    %s88 = sphi 0, %s87
    %s104 = sphi 0, %s88
    %s110 = sphi 0, %s112
    %s113 = sphi 0, %s110
    %s114 = sphi 0, %s113
    %s130 = sphi 0, %s114
  $region4: #{tpu_custom_call.1} parent=0 // loop_header_branch
    %13 = sbr.rel (%p11) target = $region8
  $region5: #{tpu_custom_call.1} parent=0 // loop_body
    %s15 = ssub.s32 %s10, 1
    %s16 = ssub.s32 %s10, 2
    %s23 = sadd.s32 1, %s18
    %p24 = scmp.ge.s32.totalorder %s23, 2
    %s25 = scalar_select %p24, 0, %s23
    %s26 = sadd.s32 1, %s17
    %s27 = scalar_select %p24, %s26, %s17
    %p28 = scmp.ge.s32.totalorder %s27, 1
    %s29 = scalar_select %p28, 0, %s27
    %s30 = ssub.s32 %s17, %s29
    %p31 = scmp.eq.s32.totalorder %s30, 0
    %s33 = sadd.s32 %s32, 1
    %s34 = scalar_select %p31, %s32, %s33
    %p37 = pneg %p31
    %p38 = scmp.eq.s32.totalorder %s10, 1
    %p39 = por %p37, %p38
    %p40 = scmp.ne.s32.totalorder %s32, %s35
    %p41 = scmp.eq.s32.totalorder %s10, 0
    %p42 = por %p40, %p41
    %p43 = scmp.ne.s32.totalorder %s32, %s35
    %p44 = scmp.eq.s32.totalorder %s15, 1
    %p45 = por %p43, %p44
    %p46 = scmp.ne.s32.totalorder %s35, %s36
    %p47 = scmp.eq.s32.totalorder %s15, 0
    %p48 = por %p46, %p47
    %p49 = scmp.ne.s32.totalorder %s35, %s36
    %p50 = scmp.eq.s32.totalorder %s16, 1
    %p51 = por %p49, %p50
    %p53 = scmp.ne.s32.totalorder %s36, %s52
    %p54 = scmp.eq.s32.totalorder %s16, 0
    %p55 = por %p53, %p54
    %s56 = ssub.s32 %s18, %s25
    %p57 = scmp.eq.s32.totalorder %s56, 0
    %s59 = sadd.s32 %s58, 1
    %s60 = scalar_select %p57, %s58, %s59
    %p63 = pneg %p57
    %p64 = scmp.eq.s32.totalorder %s10, 1
    %p65 = por %p63, %p64
    %p66 = scmp.ne.s32.totalorder %s58, %s61
    %p67 = scmp.eq.s32.totalorder %s10, 0
    %p68 = por %p66, %p67
    %p69 = scmp.ne.s32.totalorder %s58, %s61
    %p70 = scmp.eq.s32.totalorder %s15, 1
    %p71 = por %p69, %p70
    %p72 = scmp.ne.s32.totalorder %s61, %s62
    %p73 = scmp.eq.s32.totalorder %s15, 0
    %p74 = por %p72, %p73
    %p75 = scmp.ne.s32.totalorder %s61, %s62
    %p76 = scmp.eq.s32.totalorder %s16, 1
    %p77 = por %p75, %p76
    %p79 = scmp.ne.s32.totalorder %s62, %s78
    %p80 = scmp.eq.s32.totalorder %s16, 0
    %p81 = por %p79, %p80
    %s82 = ssub.s32 %s17, %s29
    %p83 = scmp.eq.s32.totalorder %s82, 0
    %s85 = sadd.s32 %s84, 1
    %s86 = scalar_select %p83, %s84, %s85
    %p89 = pneg %p83
    %p90 = scmp.eq.s32.totalorder %s10, 1
    %p91 = por %p89, %p90
    %p92 = scmp.ne.s32.totalorder %s84, %s87
    %p93 = scmp.eq.s32.totalorder %s10, 0
    %p94 = por %p92, %p93
    %p95 = scmp.ne.s32.totalorder %s84, %s87
    %p96 = scmp.eq.s32.totalorder %s15, 1
    %p97 = por %p95, %p96
    %p98 = scmp.ne.s32.totalorder %s87, %s88
    %p99 = scmp.eq.s32.totalorder %s15, 0
    %p100 = por %p98, %p99
    %p101 = scmp.ne.s32.totalorder %s87, %s88
    %p102 = scmp.eq.s32.totalorder %s16, 1
    %p103 = por %p101, %p102
    %p105 = scmp.ne.s32.totalorder %s88, %s104
    %p106 = scmp.eq.s32.totalorder %s16, 0
    %p107 = por %p105, %p106
    %s108 = ssub.s32 %s17, %s29
    %p109 = scmp.eq.s32.totalorder %s108, 0
    %s111 = sadd.s32 %s110, 1
    %s112 = scalar_select %p109, %s110, %s111
    %p115 = pneg %p109
    %p116 = scmp.eq.s32.totalorder %s10, 1
    %p117 = por %p115, %p116
    %p118 = scmp.ne.s32.totalorder %s110, %s113
    %p119 = scmp.eq.s32.totalorder %s10, 0
    %p120 = por %p118, %p119
    %p121 = scmp.ne.s32.totalorder %s110, %s113
    %p122 = scmp.eq.s32.totalorder %s15, 1
    %p123 = por %p121, %p122
    %p124 = scmp.ne.s32.totalorder %s113, %s114
    %p125 = scmp.eq.s32.totalorder %s15, 0
    %p126 = por %p124, %p125
    %p127 = scmp.ne.s32.totalorder %s113, %s114
    %p128 = scmp.eq.s32.totalorder %s16, 1
    %p129 = por %p127, %p128
    %p131 = scmp.ne.s32.totalorder %s114, %s130
    %p132 = scmp.eq.s32.totalorder %s16, 0
    %p133 = por %p131, %p132
    %p134 = scmp.le.s32.totalorder 1, %s10
    %p135 = scmp.lt.s32.totalorder %s10, 3
    %p136 = pnand %p134, %p135
    %p137 = pneg %p136
    // Predicated region
    $region9: #{tpu_custom_call.1} parent=5 // pred_check
      _
    $region10: #{tpu_custom_call.1} parent=5 // pred_check_branch
      %139 = sbr.rel (%p136) target = $region12
    $region11: #{tpu_custom_call.1} parent=5 // pred_region
      %s140 = ssub.s32 %s10, 1
      // Predicated region
      $region13: #{tpu_custom_call.1} parent=11 // pred_check
        %p141 = pneg %p48
      $region14: #{tpu_custom_call.1} parent=11 // pred_check_branch
        %143 = sbr.rel (%p141) target = $region16
      $region15: #{tpu_custom_call.1} parent=11 // pred_region
        %p144 = scmp.lt.s32.totalorder %s19, 0
        %s145 = scalar_select %p144, %s19, 0
        %s146 = smul.addr %s145, 8
        %s147 = scalar_lea.vmem %s0, %s146
      $region16: #{tpu_custom_call.1} parent=11 // pred_fallthru
        _
    $region12: #{tpu_custom_call.1} parent=5 // pred_fallthru
      _
    %p148 = scmp.lt.s32.totalorder %s10, 2
    // Predicated region
    $region17: #{tpu_custom_call.1} parent=5 // pred_check
      %p149 = pneg %p148
    $region18: #{tpu_custom_call.1} parent=5 // pred_check_branch
      %151 = sbr.rel (%p149) target = $region20
    $region19: #{tpu_custom_call.1} parent=5 // pred_region
      // Predicated region
      $region21: #{tpu_custom_call.1} parent=19 // pred_check
        %p152 = pneg %p68
      $region22: #{tpu_custom_call.1} parent=19 // pred_check_branch
        %154 = sbr.rel (%p152) target = $region24
      $region23: #{tpu_custom_call.1} parent=19 // pred_region
        %p155 = scmp.lt.s32.totalorder %s18, 1
        %s156 = scalar_select %p155, %s18, 1
        %s157 = smul.addr %s156, 4
        %s158 = scalar_lea.vmem %s1, %s157
      $region24: #{tpu_custom_call.1} parent=19 // pred_fallthru
        _
    $region20: #{tpu_custom_call.1} parent=5 // pred_fallthru
      _
    %p159 = scmp.le.s32.totalorder 1, %s10
    %p160 = scmp.lt.s32.totalorder %s10, 3
    %p161 = pnand %p159, %p160
    %p162 = pneg %p161
    // Predicated region
    $region25: #{tpu_custom_call.1} parent=5 // pred_check
      _
    $region26: #{tpu_custom_call.1} parent=5 // pred_check_branch
      %164 = sbr.rel (%p161) target = $region28
    $region27: #{tpu_custom_call.1} parent=5 // pred_region
      %s165 = ssub.s32 %s10, 1
      %p166 = scmp.lt.s32.totalorder %s19, 0
      %s167 = scalar_select %p166, %s19, 0
      %s168 = smul.addr %s167, 8
      %s169 = scalar_lea.vmem %s0, %s168
      %p170 = pneg %p48
      %p171 = pneg %p45
      %p172 = scmp.lt.s32.totalorder %s20, 1
      %s173 = scalar_select %p172, %s20, 1
      %s174 = smul.addr %s173, 4
      %s175 = scalar_lea.vmem %s1, %s174
      %p176 = pneg %p74
      %p177 = pneg %p71
      %p178 = pneg %p100
      %p179 = pneg %p97
      %p180 = scmp.lt.s32.totalorder %s19, 0
      %s181 = scalar_select %p180, %s19, 0
      %s182 = smul.addr %s181, 8
      %s183 = scalar_lea.vmem %s2, %s182
      %p184 = pneg %p126
      %p185 = pneg %p123
      %p186 = scmp.lt.s32.totalorder %s19, 0
      %s187 = scalar_select %p186, %s19, 0
      %s188 = smul.addr %s187, 8
      %s189 = scalar_lea.vmem %s3, %s188
      %p190 = scmp.lt.s32.totalorder %s19, 0
      %s191 = scalar_select %p190, %s19, 0
      %s192 = smul.addr %s191, 8
      %s193 = scalar_lea.vmem %s0, %s192
      %p194 = scmp.lt.s32.totalorder %s20, 1
      %s195 = scalar_select %p194, %s20, 1
      %s196 = smul.addr %s195, 4
      %s197 = scalar_lea.vmem %s1, %s196
      %p198 = scmp.lt.s32.totalorder %s19, 0
      %s199 = scalar_select %p198, %s19, 0
      %s200 = smul.addr %s199, 8
      %s201 = scalar_lea.vmem %s2, %s200
      %p202 = scmp.lt.s32.totalorder %s19, 0
      %s203 = scalar_select %p202, %s19, 0
      %s204 = smul.addr %s203, 8
      %s205 = scalar_lea.vmem %s3, %s204
      %p206 = scmp.eq.s32.totalorder %s20, 0
      // Predicated region
      $region29: #{tpu_custom_call.1} parent=27 // pred_check
        %p207 = pneg %p206
      $region30: #{tpu_custom_call.1} parent=27 // pred_check_branch
        %209 = sbr.rel (%p207) target = $region32
      $region31: #{tpu_custom_call.1} parent=27 // pred_region
        %vm210 = vcmask 7168
        %211 = vst.msk [vmem:[%s201] sm:$0xff] %vm210, 0.0
        %212 = vst.msk [vmem:[%s205] sm:$0xff] %vm210, 0.0
      $region32: #{tpu_custom_call.1} parent=27 // pred_fallthru
        _
      %v213 = vld [vmem:[%s197] sm:$0xf]
      %v214 = vld [vmem:[%s193] sm:$0xff]
      %s215 = scalar_lea.vmem %s193, 8
      %v216 = vld [vmem:[%s215] sm:$0xff]
      %218 = vrot.lane.b32.xlu0 %v213, 126
      %v219 = vpop.permute.xlu0 %218
      %vm220 = vcmask 31744
      %v222 = vsel %vm220, %v216, 0
      %vm224 = vcmask 1043456
      %v225 = vsel %vm224, %v219, 0
      %227 = vmatprep.subr.mxu0 0.0
      %228 = vmatpush1.msra.mxu0 %v225
      %229 = vmatprep.subr.mxu0 0.0
      %230 = vmatpush1.msra.mxu0 0.0
      %231 = vmatprep.subr.mxu0 0.0
      %232 = vmatpush1.msra.mxu0 0.0
      %233 = vmatprep.subr.mxu0 0.0
      %234 = vmatpush1.msra.mxu0 0.0
      %235 = vmatprep.subr.mxu0 0.0
      %236 = vmatpush1.msra.mxu0 0.0
      %237 = vmatprep.subr.mxu0 0.0
      %238 = vmatpush1.msra.mxu0 0.0
      %239 = vmatprep.subr.mxu0 0.0
      %240 = vmatpush1.msra.mxu0 0.0
      %241 = vmatprep.subr.mxu0 0.0
      %242 = vmatpush1.msra.mxu0 0.0
      %243 = vmatprep.subr.mxu0 0.0
      %244 = vmatpush1.msra.mxu0 0.0
      %245 = vmatprep.subr.mxu0 0.0
      %246 = vmatpush1.msra.mxu0 0.0
      %247 = vmatprep.subr.mxu0 0.0
      %248 = vmatpush1.msra.mxu0 0.0
      %249 = vmatprep.subr.mxu0 0.0
      %250 = vmatpush1.msra.mxu0 0.0
      %251 = vmatprep.subr.mxu0 0.0
      %252 = vmatpush1.msra.mxu0 0.0
      %253 = vmatprep.subr.mxu0 0.0
      %254 = vmatpush1.msra.mxu0 0.0
      %255 = vmatprep.subr.mxu0 0.0
      %256 = vmatpush1.msra.mxu0 0.0
      %257 = vmatprep.subr.mxu0 0.0
      %258 = vmatpush1.msra.mxu0 0.0
      %259 = vmatprep.subr.mxu0 0.0
      %260 = vmatpush1.msra.mxu0 0.0
      %261 = vmatprep.subr.mxu0 0.0
      %262 = vmatpush1.msra.mxu0 0.0
      %263 = vmatprep.subr.mxu0 0.0
      %264 = vmatpush1.msra.mxu0 0.0
      %265 = vmatprep.subr.mxu0 0.0
      %266 = vmatpush1.msra.mxu0 0.0
      %267 = vmatprep.subr.mxu0 0.0
      %268 = vmatpush1.msra.mxu0 0.0
      %269 = vmatprep.subr.mxu0 0.0
      %270 = vmatpush1.msra.mxu0 0.0
      %271 = vmatprep.subr.mxu0 0.0
      %272 = vmatpush1.msra.mxu0 0.0
      %273 = vmatprep.subr.mxu0 0.0
      %274 = vmatpush1.msra.mxu0 0.0
      %275 = vmatprep.subr.mxu0 0.0
      %276 = vmatpush1.msra.mxu0 0.0
      %277 = vmatprep.subr.mxu0 0.0
      %278 = vmatpush1.msra.mxu0 0.0
      %279 = vmatprep.subr.mxu0 0.0
      %280 = vmatpush1.msra.mxu0 0.0
      %281 = vmatprep.subr.mxu0 0.0
      %282 = vmatpush1.msra.mxu0 0.0
      %283 = vmatprep.subr.mxu0 0.0
      %284 = vmatpush1.msra.mxu0 0.0
      %285 = vmatprep.subr.mxu0 0.0
      %286 = vmatpush1.msra.mxu0 0.0
      %287 = vmatprep.subr.mxu0 0.0
      %288 = vmatpush1.msra.mxu0 0.0
      %289 = vmatprep.subr.mxu0 0.0
      %290 = vmatpush1.msra.mxu0 0.0
      %291 = vmatprep.mubr.f32.mxu0 0.0
      %292 = vmatmul.mubr.f32.gmra.mrb[0].mxu0 %v222
      %v293 = vpop.f32.mrb[0].mxu0
      %v294 = vadd.f32 0.0, %v293
      %v295 = vpop.f32.mrb[0].mxu0
      %296 = vdwg.mxu0
      %v298 = vsel %vm220, %v214, 0
      %v300 = vsel %vm224, %v213, 0
      %302 = vmatprep.subr.mxu0 0.0
      %303 = vmatpush1.msra.mxu0 %v300
      %304 = vmatprep.subr.mxu0 0.0
      %305 = vmatpush1.msra.mxu0 0.0
      %306 = vmatprep.subr.mxu0 0.0
      %307 = vmatpush1.msra.mxu0 0.0
      %308 = vmatprep.subr.mxu0 0.0
      %309 = vmatpush1.msra.mxu0 0.0
      %310 = vmatprep.subr.mxu0 0.0
      %311 = vmatpush1.msra.mxu0 0.0
      %312 = vmatprep.subr.mxu0 0.0
      %313 = vmatpush1.msra.mxu0 0.0
      %314 = vmatprep.subr.mxu0 0.0
      %315 = vmatpush1.msra.mxu0 0.0
      %316 = vmatprep.subr.mxu0 0.0
      %317 = vmatpush1.msra.mxu0 0.0
      %318 = vmatprep.subr.mxu0 0.0
      %319 = vmatpush1.msra.mxu0 0.0
      %320 = vmatprep.subr.mxu0 0.0
      %321 = vmatpush1.msra.mxu0 0.0
      %322 = vmatprep.subr.mxu0 0.0
      %323 = vmatpush1.msra.mxu0 0.0
      %324 = vmatprep.subr.mxu0 0.0
      %325 = vmatpush1.msra.mxu0 0.0
      %326 = vmatprep.subr.mxu0 0.0
      %327 = vmatpush1.msra.mxu0 0.0
      %328 = vmatprep.subr.mxu0 0.0
      %329 = vmatpush1.msra.mxu0 0.0
      %330 = vmatprep.subr.mxu0 0.0
      %331 = vmatpush1.msra.mxu0 0.0
      %332 = vmatprep.subr.mxu0 0.0
      %333 = vmatpush1.msra.mxu0 0.0
      %334 = vmatprep.subr.mxu0 0.0
      %335 = vmatpush1.msra.mxu0 0.0
      %336 = vmatprep.subr.mxu0 0.0
      %337 = vmatpush1.msra.mxu0 0.0
      %338 = vmatprep.subr.mxu0 0.0
      %339 = vmatpush1.msra.mxu0 0.0
      %340 = vmatprep.subr.mxu0 0.0
      %341 = vmatpush1.msra.mxu0 0.0
      %342 = vmatprep.subr.mxu0 0.0
      %343 = vmatpush1.msra.mxu0 0.0
      %344 = vmatprep.subr.mxu0 0.0
      %345 = vmatpush1.msra.mxu0 0.0
      %346 = vmatprep.subr.mxu0 0.0
      %347 = vmatpush1.msra.mxu0 0.0
      %348 = vmatprep.subr.mxu0 0.0
      %349 = vmatpush1.msra.mxu0 0.0
      %350 = vmatprep.subr.mxu0 0.0
      %351 = vmatpush1.msra.mxu0 0.0
      %352 = vmatprep.subr.mxu0 0.0
      %353 = vmatpush1.msra.mxu0 0.0
      %354 = vmatprep.subr.mxu0 0.0
      %355 = vmatpush1.msra.mxu0 0.0
      %356 = vmatprep.subr.mxu0 0.0
      %357 = vmatpush1.msra.mxu0 0.0
      %358 = vmatprep.subr.mxu0 0.0
      %359 = vmatpush1.msra.mxu0 0.0
      %360 = vmatprep.subr.mxu0 0.0
      %361 = vmatpush1.msra.mxu0 0.0
      %362 = vmatprep.subr.mxu0 0.0
      %363 = vmatpush1.msra.mxu0 0.0
      %364 = vmatprep.subr.mxu0 0.0
      %365 = vmatpush1.msra.mxu0 0.0
      %366 = vmatprep.mubr.f32.mxu0 0.0
      %367 = vmatmul.mubr.f32.gmra.mrb[0].mxu0 %v298
      %v368 = vpop.f32.mrb[0].mxu0
      %v369 = vadd.f32 %v294, %v368
      %v370 = vpop.f32.mrb[0].mxu0
      %371 = vdwg.mxu0
      %s372 = scalar_lea.vmem %s193, 16
      %v373 = vld [vmem:[%s372] sm:$0xff]
      %374 = vrot.lane.b32.xlu0 %v213, 124
      %v375 = vpop.permute.xlu0 %374
      %v377 = vsel %vm220, %v373, 0
      %v379 = vsel %vm224, %v375, 0
      %381 = vmatprep.subr.mxu0 0.0
      %382 = vmatpush1.msra.mxu0 %v379
      %383 = vmatprep.subr.mxu0 0.0
      %384 = vmatpush1.msra.mxu0 0.0
      %385 = vmatprep.subr.mxu0 0.0
      %386 = vmatpush1.msra.mxu0 0.0
      %387 = vmatprep.subr.mxu0 0.0
      %388 = vmatpush1.msra.mxu0 0.0
      %389 = vmatprep.subr.mxu0 0.0
      %390 = vmatpush1.msra.mxu0 0.0
      %391 = vmatprep.subr.mxu0 0.0
      %392 = vmatpush1.msra.mxu0 0.0
      %393 = vmatprep.subr.mxu0 0.0
      %394 = vmatpush1.msra.mxu0 0.0
      %395 = vmatprep.subr.mxu0 0.0
      %396 = vmatpush1.msra.mxu0 0.0
      %397 = vmatprep.subr.mxu0 0.0
      %398 = vmatpush1.msra.mxu0 0.0
      %399 = vmatprep.subr.mxu0 0.0
      %400 = vmatpush1.msra.mxu0 0.0
      %401 = vmatprep.subr.mxu0 0.0
      %402 = vmatpush1.msra.mxu0 0.0
      %403 = vmatprep.subr.mxu0 0.0
      %404 = vmatpush1.msra.mxu0 0.0
      %405 = vmatprep.subr.mxu0 0.0
      %406 = vmatpush1.msra.mxu0 0.0
      %407 = vmatprep.subr.mxu0 0.0
      %408 = vmatpush1.msra.mxu0 0.0
      %409 = vmatprep.subr.mxu0 0.0
      %410 = vmatpush1.msra.mxu0 0.0
      %411 = vmatprep.subr.mxu0 0.0
      %412 = vmatpush1.msra.mxu0 0.0
      %413 = vmatprep.subr.mxu0 0.0
      %414 = vmatpush1.msra.mxu0 0.0
      %415 = vmatprep.subr.mxu0 0.0
      %416 = vmatpush1.msra.mxu0 0.0
      %417 = vmatprep.subr.mxu0 0.0
      %418 = vmatpush1.msra.mxu0 0.0
      %419 = vmatprep.subr.mxu0 0.0
      %420 = vmatpush1.msra.mxu0 0.0
      %421 = vmatprep.subr.mxu0 0.0
      %422 = vmatpush1.msra.mxu0 0.0
      %423 = vmatprep.subr.mxu0 0.0
      %424 = vmatpush1.msra.mxu0 0.0
      %425 = vmatprep.subr.mxu0 0.0
      %426 = vmatpush1.msra.mxu0 0.0
      %427 = vmatprep.subr.mxu0 0.0
      %428 = vmatpush1.msra.mxu0 0.0
      %429 = vmatprep.subr.mxu0 0.0
      %430 = vmatpush1.msra.mxu0 0.0
      %431 = vmatprep.subr.mxu0 0.0
      %432 = vmatpush1.msra.mxu0 0.0
      %433 = vmatprep.subr.mxu0 0.0
      %434 = vmatpush1.msra.mxu0 0.0
      %435 = vmatprep.subr.mxu0 0.0
      %436 = vmatpush1.msra.mxu0 0.0
      %437 = vmatprep.subr.mxu0 0.0
      %438 = vmatpush1.msra.mxu0 0.0
      %439 = vmatprep.subr.mxu0 0.0
      %440 = vmatpush1.msra.mxu0 0.0
      %441 = vmatprep.subr.mxu0 0.0
      %442 = vmatpush1.msra.mxu0 0.0
      %443 = vmatprep.subr.mxu0 0.0
      %444 = vmatpush1.msra.mxu0 0.0
      %445 = vmatprep.mubr.f32.mxu0 0.0
      %446 = vmatmul.mubr.f32.gmra.mrb[0].mxu0 %v377
      %v447 = vpop.f32.mrb[0].mxu0
      %v448 = vadd.f32 0.0, %v447
      %v449 = vpop.f32.mrb[0].mxu0
      %450 = vdwg.mxu0
      %v451 = vadd.f32 %v369, %v448
      %v452 = vld [vmem:[%s201] sm:$0xff]
      %vm453 = vcmask 130048
      %v454 = vsel %vm453, %v451, 0.0
      %455 = vadd.xlane.f32.xlu0 %v454
      %v456 = vpop.xlane.xlu0 %455
      %v457 = vadd.f32 %v452, %v456
      %vm458 = vcmask 7168
      %459 = vst.msk [vmem:[%s201] sm:$0xff] %vm458, %v457
      %v460 = vld [vmem:[%s205] sm:$0xff]
      %v461 = vmul.f32 %v451, %v451
      %v462 = vsel %vm453, %v461, 0.0
      %463 = vadd.xlane.f32.xlu0 %v462
      %v464 = vpop.xlane.xlu0 %463
      %v465 = vadd.f32 %v460, %v464
      %466 = vst.msk [vmem:[%s205] sm:$0xff] %vm458, %v465
      %p467 = scmp.lt.s32.totalorder %s19, 0
      %s468 = scalar_select %p467, %s19, 0
      %s469 = smul.addr %s468, 8
      %s470 = scalar_lea.vmem %s2, %s469
      %p471 = scmp.lt.s32.totalorder %s19, 0
      %s472 = scalar_select %p471, %s19, 0
      %s473 = smul.addr %s472, 8
      %s474 = scalar_lea.vmem %s3, %s473
      // Predicated region
      $region33: #{tpu_custom_call.1} parent=27 // pred_check
        %p475 = pneg %p97
      $region34: #{tpu_custom_call.1} parent=27 // pred_check_branch
        %477 = sbr.rel (%p475) target = $region36
      $region35: #{tpu_custom_call.1} parent=27 // pred_region
        _
      $region36: #{tpu_custom_call.1} parent=27 // pred_fallthru
        _
      // Predicated region
      $region37: #{tpu_custom_call.1} parent=27 // pred_check
        %p478 = pneg %p123
      $region38: #{tpu_custom_call.1} parent=27 // pred_check_branch
        %480 = sbr.rel (%p478) target = $region40
      $region39: #{tpu_custom_call.1} parent=27 // pred_region
        _
      $region40: #{tpu_custom_call.1} parent=27 // pred_fallthru
        _
      // Predicated region
      $region41: #{tpu_custom_call.1} parent=27 // pred_check
        %p481 = pneg %p97
      $region42: #{tpu_custom_call.1} parent=27 // pred_check_branch
        %483 = sbr.rel (%p481) target = $region44
      $region43: #{tpu_custom_call.1} parent=27 // pred_region
        %p484 = scmp.lt.s32.totalorder %s19, 0
        %s485 = scalar_select %p484, %s19, 0
        %s486 = smul.addr %s485, 8
        %s487 = scalar_lea.vmem %s2, %s486
      $region44: #{tpu_custom_call.1} parent=27 // pred_fallthru
        _
      // Predicated region
      $region45: #{tpu_custom_call.1} parent=27 // pred_check
        %p488 = pneg %p123
      $region46: #{tpu_custom_call.1} parent=27 // pred_check_branch
        %490 = sbr.rel (%p488) target = $region48
      $region47: #{tpu_custom_call.1} parent=27 // pred_region
        %p491 = scmp.lt.s32.totalorder %s19, 0
        %s492 = scalar_select %p491, %s19, 0
        %s493 = smul.addr %s492, 8
        %s494 = scalar_lea.vmem %s3, %s493
      $region48: #{tpu_custom_call.1} parent=27 // pred_fallthru
        _
    $region28: #{tpu_custom_call.1} parent=5 // pred_fallthru
      _
    %p495 = scmp.le.s32.totalorder 2, %s10
    // Predicated region
    $region49: #{tpu_custom_call.1} parent=5 // pred_check
      %p496 = pneg %p495
    $region50: #{tpu_custom_call.1} parent=5 // pred_check_branch
      %498 = sbr.rel (%p496) target = $region52
    $region51: #{tpu_custom_call.1} parent=5 // pred_region
      %s499 = ssub.s32 %s10, 2
    $region52: #{tpu_custom_call.1} parent=5 // pred_fallthru
      _
  $region6: #{tpu_custom_call.1} parent=0 // loop_footer
    %s14 = sadd.s32 1, %s10
  $region7: #{tpu_custom_call.1} parent=0 // loop_footer_branch
    %9 = sbr.rel target = $region3
  $region8: #{tpu_custom_call.1} parent=0 // loop_exit
    _

</llo_original>
